<compile_context>
chip_gen: v7x
topology: tpu7x:2x2x1
jax: 0.10.0
libtpu: 0.0.40
codegen_flags: <defaults>
</compile_context>

<pallas_src>
import functools

import jax
import jax.numpy as jnp
from jax.experimental import pallas as pl
from jax.experimental.pallas import tpu as pltpu

_LANE = 128
_MAX_TILE_ROWS = 4096            # 4096 x 128 f32 block = 2 MiB per operand
_VMEM_LIMIT = 32 * 1024 * 1024   # raises v5e's 16 MiB default; <= v7x physical
_PAD_LOGIT = -30.0               # sigmoid(-30) ~ 9e-14; safe for f16/bf16/f32


def _dice_partial_kernel(gt_ref, lg_ref, out_ref, sp_ref, sg_ref, ip_ref,
                         *, last_tile_rows):
    t = pl.program_id(1)
    nt = pl.num_programs(1)

    @pl.when(t == 0)
    def _():
        sp_ref[...] = jnp.zeros_like(sp_ref)
        sg_ref[...] = jnp.zeros_like(sg_ref)
        ip_ref[...] = jnp.zeros_like(ip_ref)

    def _accumulate(valid_rows):
        x = lg_ref[...].astype(jnp.float32)            # (1, TR, 128)
        # sigmoid(x) == 0.5 * tanh(x / 2) + 0.5 : a single EUP transcendental.
        p = 0.5 * jnp.tanh(0.5 * x) + 0.5
        g = gt_ref[...] > 0                            # bool {0,1} mask
        if valid_rows is not None:                     # mask OOB rows, last tile only
            row = jax.lax.broadcasted_iota(jnp.int32, x.shape, 1)
            ok = row < valid_rows
            p = jnp.where(ok, p, 0.0)
            g = jnp.logical_and(g, ok)
        # Per-lane partial sums (sublane reduction only in the hot loop).
        sp_ref[...] += jnp.sum(p, axis=1)                         # (1, 128)
        sg_ref[...] += jnp.sum(g.astype(jnp.float32), axis=1)
        ip_ref[...] += jnp.sum(jnp.where(g, p, 0.0), axis=1)      # select, no mul

    if last_tile_rows is None:        # tiles divide rows evenly: no masking at all
        _accumulate(None)
    else:
        @pl.when(t < nt - 1)
        def _():
            _accumulate(None)

        @pl.when(t == nt - 1)
        def _():
            _accumulate(last_tile_rows)

    @pl.when(t == nt - 1)
    def _():
        out_ref[0, 0:1, :] = sp_ref[...]
        out_ref[0, 1:2, :] = sg_ref[...]
        out_ref[0, 2:3, :] = ip_ref[...]


def dice_loss_v1(gt, logits, *, smooth=1e-07, weight=None):
    """gt: [B,1,H,W] (int/float/bool 0-1 mask), logits: [B,1,H,W] raw logits."""
    B, C, H, W = logits.shape
    assert C == 1, "DiceLossV1 only defines the num_classes == 1 path"
    S = H * W
    rows = pl.cdiv(S, _LANE)

    lg = logits.reshape(B, S)
    gt2 = gt.reshape(B, S)
    pad = rows * _LANE - S
    if pad:
        # Only the <128-element tail is ever padded; pads contribute ~0.
        lg = jnp.pad(lg, ((0, 0), (0, pad)), constant_values=_PAD_LOGIT)
        gt2 = jnp.pad(gt2, ((0, 0), (0, pad)))

    # Spatial split so an odd / size-1 batch still fills both v7x TensorCores.
    P = 2 if (B % 2 == 1 and rows % 2 == 0 and rows >= 16) else 1
    BP = B * P
    rows_p = rows // P
    lg3 = lg.reshape(BP, rows_p, _LANE)      # free reshape (no copy)
    gt3 = gt2.reshape(BP, rows_p, _LANE)

    tile_rows = min(rows_p, _MAX_TILE_ROWS)
    n_tiles = pl.cdiv(rows_p, tile_rows)
    rem = rows_p - (n_tiles - 1) * tile_rows
    last_tile_rows = None if rem == tile_rows else rem

    kernel = functools.partial(_dice_partial_kernel,
                               last_tile_rows=last_tile_rows)

    n_elems = BP * rows_p * _LANE
    bytes_in = n_elems * (jnp.dtype(logits.dtype).itemsize
                          + jnp.dtype(gt.dtype).itemsize)

    partials = pl.pallas_call(
        kernel,
        out_shape=jax.ShapeDtypeStruct((BP, 3, _LANE), jnp.float32),
        grid_spec=pltpu.PrefetchScalarGridSpec(
            num_scalar_prefetch=0,
            grid=(BP, n_tiles),
            in_specs=[
                pl.BlockSpec((1, tile_rows, _LANE), lambda i, t: (i, t, 0)),
                pl.BlockSpec((1, tile_rows, _LANE), lambda i, t: (i, t, 0)),
            ],
            out_specs=pl.BlockSpec((1, 3, _LANE), lambda i, t: (i, 0, 0)),
            scratch_shapes=[
                pltpu.VMEM((1, _LANE), jnp.float32),   # sum(pos_prob)
                pltpu.VMEM((1, _LANE), jnp.float32),   # sum(gt > 0)
                pltpu.VMEM((1, _LANE), jnp.float32),   # sum(pos_prob * gt)
            ],
        ),
        compiler_params=pltpu.CompilerParams(
            dimension_semantics=("parallel", "arbitrary"),
            allow_input_fusion=[True, True],
            vmem_limit_bytes=_VMEM_LIMIT,
        ),
        cost_estimate=pl.CostEstimate(
            flops=8 * n_elems,
            transcendentals=n_elems,                   # one tanh per element
            bytes_accessed=bytes_in + BP * 3 * _LANE * 4,
        ),
    )(gt3, lg3)

    # Tiny dice epilogue in JAX: combine spatial splits + lanes, then the
    # is_pos selection / weighting / batch mean exactly as the reference does.
    sums = partials.reshape(B, P, 3, _LANE).sum(axis=(1, 3))   # (B, 3) f32
    sum_p, sum_g, inter_pos = sums[:, 0], sums[:, 1], sums[:, 2]

    n = jnp.float32(S)
    card_pos = sum_p + sum_g
    inter_neg = n - sum_p - sum_g + inter_pos        # sum((1-p) * (1-gt))
    card_neg = 2.0 * n - sum_p - sum_g               # sum(1-p) + sum(1-gt)
    loss_neg = 1.0 - 2.0 * inter_neg / (card_neg + smooth)
    loss_pos = 1.0 - 2.0 * inter_pos / (card_pos + smooth)

    dice = jnp.stack([loss_neg, loss_pos], axis=1)   # (B, 2): [background, fg]
    if weight is not None:
        dice = jnp.asarray(weight, jnp.float32) * dice   # same broadcast as ref
    is_pos = sum_g > 0.0
    return jnp.where(is_pos, dice[:, 1], dice[:, 0]).mean()


def _dice_loss_v1_ref(gt, logits, smooth=1e-07, weight=None):
    """Pure-JAX reference mirroring the PyTorch forward (num_classes == 1)."""
    gt = gt.astype(jnp.int32)
    gt_sq = gt[:, 0]                                         # [B, H, W]
    gt_1_hot = jax.nn.one_hot(gt_sq, 2, dtype=jnp.float32)   # [B, H, W, 2]
    gt_1_hot = jnp.transpose(gt_1_hot, (0, 3, 1, 2))         # [B, 2, H, W]
    pos_prob = jax.nn.sigmoid(logits.astype(jnp.float32))
    probas = jnp.concatenate([1.0 - pos_prob, pos_prob], axis=1)
    is_pos = (gt > 0).sum(axis=(1, 2, 3)) > 0
    inter = jnp.sum(probas * gt_1_hot, axis=(2, 3))
    card = jnp.sum(probas + gt_1_hot, axis=(2, 3))
    dice_loss = 1.0 - 2.0 * inter / (card + smooth)
    if weight is not None:
        dice_loss = jnp.asarray(weight, jnp.float32) * dice_loss
    return jnp.where(is_pos, dice_loss[:, 1:].mean(1), dice_loss[:, 0]).mean()


if __name__ == "__main__":
    key = jax.random.PRNGKey(0)
    k1, k2, k3, k4, k5, k6 = jax.random.split(key, 6)

    # --- Case 1: B=2, 16x16 (S multiple of 128, even batch) ------------------
    B, C, H, W = 2, 1, 16, 16
    logits = jax.random.normal(k1, (B, C, H, W), dtype=jnp.float32)
    gt = (jax.random.uniform(k2, (B, C, H, W)) > 0.7).astype(jnp.int32)
    gt = gt.at[1].set(0)             # one all-background sample -> neg branch

    loss = jax.block_until_ready(dice_loss_v1(gt, logits))
    ref = _dice_loss_v1_ref(gt, logits)
    assert jnp.allclose(loss, ref, atol=1e-5, rtol=1e-5), (loss, ref)

    # Weighted path.
    w = [0.4, 1.6]
    loss_w = jax.block_until_ready(dice_loss_v1(gt, logits, weight=w))
    ref_w = _dice_loss_v1_ref(gt, logits, weight=w)
    assert jnp.allclose(loss_w, ref_w, atol=1e-5, rtol=1e-5), (loss_w, ref_w)

    # --- Case 2: B=1, 48x48 -> odd batch, spatial split P=2 ------------------
    B2, H2, W2 = 1, 48, 48
    logits2 = jax.random.normal(k3, (B2, 1, H2, W2), dtype=jnp.float32)
    gtm2 = (jax.random.uniform(k4, (B2, 1, H2, W2)) > 0.6).astype(jnp.int32)
    loss2 = jax.block_until_ready(dice_loss_v1(gtm2, logits2))
    ref2 = _dice_loss_v1_ref(gtm2, logits2)
    assert jnp.allclose(loss2, ref2, atol=1e-5, rtol=1e-5), (loss2, ref2)

    # --- Case 3: B=2, 725x725 -> tail pad (S % 128 != 0) and a partial last
    #     spatial tile exercising the in-kernel row-masking branch ------------
    B3, H3, W3 = 2, 725, 725
    logits3 = jax.random.normal(k5, (B3, 1, H3, W3), dtype=jnp.float32)
    gtm3 = (jax.random.uniform(k6, (B3, 1, H3, W3)) > 0.8).astype(jnp.int32)
    loss3 = jax.block_until_ready(dice_loss_v1(gtm3, logits3))
    ref3 = _dice_loss_v1_ref(gtm3, logits3)
    assert jnp.allclose(loss3, ref3, atol=1e-4, rtol=1e-4), (loss3, ref3)

    print("KERNEL_OK")
</pallas_src>

<mosaic_0001>
module attributes {stable_mosaic.version = 11 : i64} {
  func.func @_dice_partial_kernel(%arg0: i32, %arg1: i32, %arg2: memref<1x2x128xi32, #tpu.memory_space<vmem>>, %arg3: memref<1x2x128xf32, #tpu.memory_space<vmem>>, %arg4: memref<1x3x128xf32, #tpu.memory_space<vmem>>, %arg5: memref<1x128xf32, #tpu.memory_space<vmem>>, %arg6: memref<1x128xf32, #tpu.memory_space<vmem>>, %arg7: memref<1x128xf32, #tpu.memory_space<vmem>>) attributes {dimension_semantics = [#tpu.dimension_semantics<parallel>, #tpu.dimension_semantics<arbitrary>], iteration_bounds = array<i64: 2, 1>, scalar_prefetch = 0 : i64, scratch_operands = 3 : i64, tpu.core_type = #tpu.core_type<tc>, window_params = [{transform_indices = @transform_0, window_bounds = array<i64: 1, 2, 128>}, {transform_indices = @transform_1, window_bounds = array<i64: 1, 2, 128>}, {transform_indices = @transform_2, window_bounds = array<i64: 1, 3, 128>}]} {
    %c0_i32 = arith.constant 0 : i32
    %0 = arith.cmpi eq, %arg1, %c0_i32 : i32
    %1 = arith.extui %0 : i1 to i32
    %c0_i32_0 = arith.constant 0 : i32
    %2 = arith.cmpi ne, %1, %c0_i32_0 : i32
    scf.if %2 {
      %cst_27 = arith.constant 0.000000e+00 : f32
      %33 = vector.broadcast %cst_27 : f32 to vector<1x128xf32>
      %c0_28 = arith.constant 0 : index
      %c0_29 = arith.constant 0 : index
      %34 = vector.load %arg5[%c0_28, %c0_29] : memref<1x128xf32, #tpu.memory_space<vmem>>, vector<1x128xf32>
      tpu.vector_store %arg5[%c0_28, %c0_29], %33 {strides = array<i32>} : memref<1x128xf32, #tpu.memory_space<vmem>>, vector<1x128xf32>,
      %cst_30 = arith.constant 0.000000e+00 : f32
      %35 = vector.broadcast %cst_30 : f32 to vector<1x128xf32>
      %c0_31 = arith.constant 0 : index
      %c0_32 = arith.constant 0 : index
      %36 = vector.load %arg6[%c0_31, %c0_32] : memref<1x128xf32, #tpu.memory_space<vmem>>, vector<1x128xf32>
      tpu.vector_store %arg6[%c0_31, %c0_32], %35 {strides = array<i32>} : memref<1x128xf32, #tpu.memory_space<vmem>>, vector<1x128xf32>,
      %cst_33 = arith.constant 0.000000e+00 : f32
      %37 = vector.broadcast %cst_33 : f32 to vector<1x128xf32>
      %c0_34 = arith.constant 0 : index
      %c0_35 = arith.constant 0 : index
      %38 = vector.load %arg7[%c0_34, %c0_35] : memref<1x128xf32, #tpu.memory_space<vmem>>, vector<1x128xf32>
      tpu.vector_store %arg7[%c0_34, %c0_35], %37 {strides = array<i32>} : memref<1x128xf32, #tpu.memory_space<vmem>>, vector<1x128xf32>,
    } else {
    }
    %c0 = arith.constant 0 : index
    %c0_1 = arith.constant 0 : index
    %c0_2 = arith.constant 0 : index
    %3 = vector.load %arg3[%c0, %c0_1, %c0_2] : memref<1x2x128xf32, #tpu.memory_space<vmem>>, vector<1x2x128xf32>
    %cst = arith.constant 5.000000e-01 : f32
    %4 = vector.broadcast %cst : f32 to vector<1x2x128xf32>
    %5 = arith.mulf %4, %3 : vector<1x2x128xf32>
    %6 = math.tanh %5 : vector<1x2x128xf32>
    %cst_3 = arith.constant 5.000000e-01 : f32
    %7 = vector.broadcast %cst_3 : f32 to vector<1x2x128xf32>
    %8 = arith.mulf %7, %6 : vector<1x2x128xf32>
    %cst_4 = arith.constant 5.000000e-01 : f32
    %9 = vector.broadcast %cst_4 : f32 to vector<1x2x128xf32>
    %10 = arith.addf %8, %9 : vector<1x2x128xf32>
    %c0_5 = arith.constant 0 : index
    %c0_6 = arith.constant 0 : index
    %c0_7 = arith.constant 0 : index
    %11 = vector.load %arg2[%c0_5, %c0_6, %c0_7] : memref<1x2x128xi32, #tpu.memory_space<vmem>>, vector<1x2x128xi32>
    %c0_i32_8 = arith.constant 0 : i32
    %12 = vector.broadcast %c0_i32_8 : i32 to vector<1x2x128xi32>
    %13 = arith.cmpi sgt, %11, %12 : vector<1x2x128xi32>
    %c0_9 = arith.constant 0 : index
    %c0_10 = arith.constant 0 : index
    %14 = vector.load %arg5[%c0_9, %c0_10] : memref<1x128xf32, #tpu.memory_space<vmem>>, vector<1x128xf32>
    %cst_11 = arith.constant dense<0.000000e+00> : vector<1x128xf32>
    %15 = vector.multi_reduction <add>, %10, %cst_11 [1] : vector<1x2x128xf32> to vector<1x128xf32>
    %16 = arith.addf %14, %15 : vector<1x128xf32>
    %c0_12 = arith.constant 0 : index
    %c0_13 = arith.constant 0 : index
    %17 = vector.load %arg5[%c0_12, %c0_13] : memref<1x128xf32, #tpu.memory_space<vmem>>, vector<1x128xf32>
    tpu.vector_store %arg5[%c0_12, %c0_13], %16 {strides = array<i32>} : memref<1x128xf32, #tpu.memory_space<vmem>>, vector<1x128xf32>,
    %c0_14 = arith.constant 0 : index
    %c0_15 = arith.constant 0 : index
    %18 = vector.load %arg6[%c0_14, %c0_15] : memref<1x128xf32, #tpu.memory_space<vmem>>, vector<1x128xf32>
    %19 = arith.extui %13 : vector<1x2x128xi1> to vector<1x2x128xi32>
    %20 = arith.sitofp %19 : vector<1x2x128xi32> to vector<1x2x128xf32>
    %cst_16 = arith.constant dense<0.000000e+00> : vector<1x128xf32>
    %21 = vector.multi_reduction <add>, %20, %cst_16 [1] : vector<1x2x128xf32> to vector<1x128xf32>
    %22 = arith.addf %18, %21 : vector<1x128xf32>
    %c0_17 = arith.constant 0 : index
    %c0_18 = arith.constant 0 : index
    %23 = vector.load %arg6[%c0_17, %c0_18] : memref<1x128xf32, #tpu.memory_space<vmem>>, vector<1x128xf32>
    tpu.vector_store %arg6[%c0_17, %c0_18], %22 {strides = array<i32>} : memref<1x128xf32, #tpu.memory_space<vmem>>, vector<1x128xf32>,
    %c0_19 = arith.constant 0 : index
    %c0_20 = arith.constant 0 : index
    %24 = vector.load %arg7[%c0_19, %c0_20] : memref<1x128xf32, #tpu.memory_space<vmem>>, vector<1x128xf32>
    %cst_21 = arith.constant 0.000000e+00 : f32
    %25 = vector.broadcast %cst_21 : f32 to vector<1x2x128xf32>
    %26 = arith.select %13, %10, %25 : vector<1x2x128xi1>, vector<1x2x128xf32>
    %cst_22 = arith.constant dense<0.000000e+00> : vector<1x128xf32>
    %27 = vector.multi_reduction <add>, %26, %cst_22 [1] : vector<1x2x128xf32> to vector<1x128xf32>
    %28 = arith.addf %24, %27 : vector<1x128xf32>
    %c0_23 = arith.constant 0 : index
    %c0_24 = arith.constant 0 : index
    %29 = vector.load %arg7[%c0_23, %c0_24] : memref<1x128xf32, #tpu.memory_space<vmem>>, vector<1x128xf32>
    tpu.vector_store %arg7[%c0_23, %c0_24], %28 {strides = array<i32>} : memref<1x128xf32, #tpu.memory_space<vmem>>, vector<1x128xf32>,
    %c0_i32_25 = arith.constant 0 : i32
    %30 = arith.cmpi eq, %arg1, %c0_i32_25 : i32
    %31 = arith.extui %30 : i1 to i32
    %c0_i32_26 = arith.constant 0 : i32
    %32 = arith.cmpi ne, %31, %c0_i32_26 : i32
    scf.if %32 {
      %c0_27 = arith.constant 0 : index
      %c0_28 = arith.constant 0 : index
      %33 = vector.load %arg5[%c0_27, %c0_28] : memref<1x128xf32, #tpu.memory_space<vmem>>, vector<1x128xf32>
      %c0_29 = arith.constant 0 : index
      %c0_30 = arith.constant 0 : index
      %c0_31 = arith.constant 0 : index
      %34 = vector.load %arg4[%c0_29, %c0_30, %c0_31] : memref<1x3x128xf32, #tpu.memory_space<vmem>>, vector<1x1x128xf32>
      %35 = vector.shape_cast %34 : vector<1x1x128xf32> to vector<1x128xf32>
      %36 = vector.shape_cast %33 : vector<1x128xf32> to vector<1x1x128xf32>
      tpu.vector_store %arg4[%c0_29, %c0_30, %c0_31], %36 {strides = array<i32>} : memref<1x3x128xf32, #tpu.memory_space<vmem>>, vector<1x1x128xf32>,
      %c0_32 = arith.constant 0 : index
      %c0_33 = arith.constant 0 : index
      %37 = vector.load %arg6[%c0_32, %c0_33] : memref<1x128xf32, #tpu.memory_space<vmem>>, vector<1x128xf32>
      %c0_34 = arith.constant 0 : index
      %c1 = arith.constant 1 : index
      %c0_35 = arith.constant 0 : index
      %38 = vector.load %arg4[%c0_34, %c1, %c0_35] : memref<1x3x128xf32, #tpu.memory_space<vmem>>, vector<1x1x128xf32>
      %39 = vector.shape_cast %38 : vector<1x1x128xf32> to vector<1x128xf32>
      %40 = vector.shape_cast %37 : vector<1x128xf32> to vector<1x1x128xf32>
      tpu.vector_store %arg4[%c0_34, %c1, %c0_35], %40 {strides = array<i32>} : memref<1x3x128xf32, #tpu.memory_space<vmem>>, vector<1x1x128xf32>,
      %c0_36 = arith.constant 0 : index
      %c0_37 = arith.constant 0 : index
      %41 = vector.load %arg7[%c0_36, %c0_37] : memref<1x128xf32, #tpu.memory_space<vmem>>, vector<1x128xf32>
      %c0_38 = arith.constant 0 : index
      %c2 = arith.constant 2 : index
      %c0_39 = arith.constant 0 : index
      %42 = vector.load %arg4[%c0_38, %c2, %c0_39] : memref<1x3x128xf32, #tpu.memory_space<vmem>>, vector<1x1x128xf32>
      %43 = vector.shape_cast %42 : vector<1x1x128xf32> to vector<1x128xf32>
      %44 = vector.shape_cast %41 : vector<1x128xf32> to vector<1x1x128xf32>
      tpu.vector_store %arg4[%c0_38, %c2, %c0_39], %44 {strides = array<i32>} : memref<1x3x128xf32, #tpu.memory_space<vmem>>, vector<1x1x128xf32>,
    } else {
    }
    return
  }
  func.func @transform_0(%arg0: i32, %arg1: i32) -> (i32, i32, i32) {
    %c0_i32 = arith.constant 0 : i32
    %c0_i32_0 = arith.constant 0 : i32
    return %arg0, %arg1, %c0_i32 : i32, i32, i32
  }
  func.func @transform_1(%arg0: i32, %arg1: i32) -> (i32, i32, i32) {
    %c0_i32 = arith.constant 0 : i32
    %c0_i32_0 = arith.constant 0 : i32
    return %arg0, %arg1, %c0_i32 : i32, i32, i32
  }
  func.func @transform_2(%arg0: i32, %arg1: i32) -> (i32, i32, i32) {
    %c0_i32 = arith.constant 0 : i32
    %c0_i32_0 = arith.constant 0 : i32
    %c0_i32_1 = arith.constant 0 : i32
    return %arg0, %c0_i32, %c0_i32_0 : i32, i32, i32
  }
}

</mosaic_0001>

<llo_original>
// kernel: tpu_custom_call.1
$region0: #{tpu_custom_call.1}
  #allocation0 [shape = 'u32[]', space=smem, size = 0x4, offset = 0x4, fixed_abs, tag = 'smem constant byte address 0x4 - core index']
  #allocation1 [shape = 'u32[144,128]{1,0:T(1,128)}', space=vmem, size = 0x12000, scoped, tag = 'internal scratch']
  #allocation2 [shape = 'f32[1,128]{1,0:T(1,128)}', space=vmem, size = 0x200, scoped, tag = 'scratch operand']
  #allocation3 [shape = 'f32[1,128]{1,0:T(1,128)}', space=vmem, size = 0x200, scoped, tag = 'scratch operand']
  #allocation4 [shape = 'f32[1,128]{1,0:T(1,128)}', space=vmem, size = 0x200, scoped, tag = 'scratch operand']
  %s0 = inlined_call_operand.hbm [shape: s32[2,2,128], index: 0, kind: input, shape index: {}]
  %s1 = inlined_call_operand.hbm [shape: f32[2,2,128], index: 1, kind: input, shape index: {}]
  %s2 = inlined_call_operand.vmem [shape: f32[2,3,128], index: 2, kind: output, shape index: {}]
  %s3 = sld [smem:[#allocation0]]
  $region57: #{tpu_custom_call.1} parent=0
    _
  %s5 = ssub.s32 1, %s3
  %s6 = scalar_select 0, %s5, %s3
  $region1: #{tpu_custom_call.1} parent=0
    #allocation5 [shape = 'u8[2048]{0}', space=vmem, size = 0x800, scoped, tag = 'input window, operand 0']
    #allocation6 [shape = 's32[2]{0}', space=sflag, size = 0x8, scoped, tag = 'scoped memory for tpu_custom_call.1']
    #allocation7 [shape = 'u8[2048]{0}', space=vmem, size = 0x800, scoped, tag = 'input window, operand 1']
    #allocation8 [shape = 's32[2]{0}', space=sflag, size = 0x8, scoped, tag = 'scoped memory for tpu_custom_call.1']
    %7 = vsyncpa [#allocation6], 0
    %s8 = scalar_lea.sflag [#allocation6], 1
    %9 = vsyncpa %s8, 0
    %10 = vsyncpa [#allocation8], 0
    %s11 = scalar_lea.sflag [#allocation8], 1
    %12 = vsyncpa %s11, 0
    loop: start=0, step=1, limit=4
    $region2: #{tpu_custom_call.1} parent=1 // loop_pre_header
      _
    $region3: #{tpu_custom_call.1} parent=1 // loop_header
      %s14 = sphi 0, %s18
      %p15 = scmp.ge.s32.totalorder %s14, 4
      %s21 = sphi 0, %s33
      %s22 = sphi 0, %s29
      %s23 = sphi 0, %s21
      %s24 = sphi 0, %s22
      %s25 = sphi 0, %s23
      %s26 = sphi 0, %s24
      %s38 = sphi 0, %s40
      %s41 = sphi 0, %s38
      %s42 = sphi 0, %s41
      %s58 = sphi 0, %s42
      %s66 = sphi 0, %s68
      %s69 = sphi 0, %s66
      %s70 = sphi 0, %s69
      %s86 = sphi 0, %s70
      %s92 = sphi 0, %s94
      %s95 = sphi 0, %s92
      %s96 = sphi 0, %s95
      %s112 = sphi 0, %s96
    $region4: #{tpu_custom_call.1} parent=1 // loop_header_branch
      %17 = sbr.rel (%p15) target = $region8
    $region5: #{tpu_custom_call.1} parent=1 // loop_body
      %s19 = ssub.s32 %s14, 1
      %s20 = ssub.s32 %s14, 2
      %s27 = sadd.s32 1, %s22
      %p28 = scmp.ge.s32.totalorder %s27, 1
      %s29 = scalar_select %p28, 0, %s27
      %s30 = sadd.s32 1, %s21
      %s31 = scalar_select %p28, %s30, %s21
      %p32 = scmp.ge.s32.totalorder %s31, 2
      %s33 = scalar_select %p32, 0, %s31
      %s34 = ssub.s32 %s21, %s33
      %s35 = ssub.s32 %s22, %s29
      %s36 = sor.u32 %s34, %s35
      %p37 = scmp.eq.s32.totalorder %s36, 0
      %s39 = sadd.s32 %s38, 1
      %s40 = scalar_select %p37, %s38, %s39
      %p43 = pneg %p37
      %p44 = scmp.eq.s32.totalorder %s14, 1
      %p45 = por %p43, %p44
      %p46 = scmp.ne.s32.totalorder %s38, %s41
      %p47 = scmp.eq.s32.totalorder %s14, 0
      %p48 = por %p46, %p47
      %p49 = scmp.ne.s32.totalorder %s38, %s41
      %p50 = scmp.eq.s32.totalorder %s19, 1
      %p51 = por %p49, %p50
      %p52 = scmp.ne.s32.totalorder %s41, %s42
      %p53 = scmp.eq.s32.totalorder %s19, 0
      %p54 = por %p52, %p53
      %p55 = scmp.ne.s32.totalorder %s41, %s42
      %p56 = scmp.eq.s32.totalorder %s20, 1
      %p57 = por %p55, %p56
      %p59 = scmp.ne.s32.totalorder %s42, %s58
      %p60 = scmp.eq.s32.totalorder %s20, 0
      %p61 = por %p59, %p60
      %s62 = ssub.s32 %s21, %s33
      %s63 = ssub.s32 %s22, %s29
      %s64 = sor.u32 %s62, %s63
      %p65 = scmp.eq.s32.totalorder %s64, 0
      %s67 = sadd.s32 %s66, 1
      %s68 = scalar_select %p65, %s66, %s67
      %p71 = pneg %p65
      %p72 = scmp.eq.s32.totalorder %s14, 1
      %p73 = por %p71, %p72
      %p74 = scmp.ne.s32.totalorder %s66, %s69
      %p75 = scmp.eq.s32.totalorder %s14, 0
      %p76 = por %p74, %p75
      %p77 = scmp.ne.s32.totalorder %s66, %s69
      %p78 = scmp.eq.s32.totalorder %s19, 1
      %p79 = por %p77, %p78
      %p80 = scmp.ne.s32.totalorder %s69, %s70
      %p81 = scmp.eq.s32.totalorder %s19, 0
      %p82 = por %p80, %p81
      %p83 = scmp.ne.s32.totalorder %s69, %s70
      %p84 = scmp.eq.s32.totalorder %s20, 1
      %p85 = por %p83, %p84
      %p87 = scmp.ne.s32.totalorder %s70, %s86
      %p88 = scmp.eq.s32.totalorder %s20, 0
      %p89 = por %p87, %p88
      %s90 = ssub.s32 %s21, %s33
      %p91 = scmp.eq.s32.totalorder %s90, 0
      %s93 = sadd.s32 %s92, 1
      %s94 = scalar_select %p91, %s92, %s93
      %p97 = pneg %p91
      %p98 = scmp.eq.s32.totalorder %s14, 1
      %p99 = por %p97, %p98
      %p100 = scmp.ne.s32.totalorder %s92, %s95
      %p101 = scmp.eq.s32.totalorder %s14, 0
      %p102 = por %p100, %p101
      %p103 = scmp.ne.s32.totalorder %s92, %s95
      %p104 = scmp.eq.s32.totalorder %s19, 1
      %p105 = por %p103, %p104
      %p106 = scmp.ne.s32.totalorder %s95, %s96
      %p107 = scmp.eq.s32.totalorder %s19, 0
      %p108 = por %p106, %p107
      %p109 = scmp.ne.s32.totalorder %s95, %s96
      %p110 = scmp.eq.s32.totalorder %s20, 1
      %p111 = por %p109, %p110
      %p113 = scmp.ne.s32.totalorder %s96, %s112
      %p114 = scmp.eq.s32.totalorder %s20, 0
      %p115 = por %p113, %p114
      %p116 = scmp.le.s32.totalorder 1, %s14
      %p117 = scmp.lt.s32.totalorder %s14, 3
      %p118 = pnand %p116, %p117
      %p119 = pneg %p118
      // Predicated region
      $region9: #{tpu_custom_call.1} parent=5 // pred_check
        _
      $region10: #{tpu_custom_call.1} parent=5 // pred_check_branch
        %121 = sbr.rel (%p118) target = $region12
      $region11: #{tpu_custom_call.1} parent=5 // pred_region
        %s122 = ssub.s32 %s14, 1
      $region12: #{tpu_custom_call.1} parent=5 // pred_fallthru
        _
      %p123 = scmp.lt.s32.totalorder %s14, 2
      // Predicated region
      $region13: #{tpu_custom_call.1} parent=5 // pred_check
        %p124 = pneg %p123
      $region14: #{tpu_custom_call.1} parent=5 // pred_check_branch
        %126 = sbr.rel (%p124) target = $region16
      $region15: #{tpu_custom_call.1} parent=5 // pred_region
        // Predicated region
        $region17: #{tpu_custom_call.1} parent=15 // pred_check
          %p127 = pneg %p48
        $region18: #{tpu_custom_call.1} parent=15 // pred_check_branch
          %129 = sbr.rel (%p127) target = $region20
        $region19: #{tpu_custom_call.1} parent=15 // pred_region
          %s130 = sand.u32 %s38, 1
          %s131 = scalar_lea.sflag [#allocation6], %s130
          %s132 = sand.u32 %s38, 1
          %s133 = smul.addr %s132, 2
          %s134 = scalar_lea.vmem [#allocation5], %s133
          %s136 = ssub.s32 32, 32
          %137 = vsyncadd %s131, %s136
          %s138 = sadd.s32 %s22, %s21
          %s139 = smul.addr %s138, 32
          %s140 = scalar_lea.hbm %s0, %s139
          %s142 = sshll.u32 %s134, 4
          %s143 = int_to_ptr.vmem [resolvable:$true] %s142
          %145 = dma.hbm_to_vmem [thread:$0]  %s140, 32, %s143, %s131
        $region20: #{tpu_custom_call.1} parent=15 // pred_fallthru
          _
        // Predicated region
        $region21: #{tpu_custom_call.1} parent=15 // pred_check
          %p146 = pneg %p76
        $region22: #{tpu_custom_call.1} parent=15 // pred_check_branch
          %148 = sbr.rel (%p146) target = $region24
        $region23: #{tpu_custom_call.1} parent=15 // pred_region
          %s149 = sand.u32 %s66, 1
          %s150 = scalar_lea.sflag [#allocation8], %s149
          %s151 = sand.u32 %s66, 1
          %s152 = smul.addr %s151, 2
          %s153 = scalar_lea.vmem [#allocation7], %s152
          %s155 = ssub.s32 32, 32
          %156 = vsyncadd %s150, %s155
          %s157 = sadd.s32 %s22, %s21
          %s158 = smul.addr %s157, 32
          %s159 = scalar_lea.hbm %s1, %s158
          %s161 = sshll.u32 %s153, 4
          %s162 = int_to_ptr.vmem [resolvable:$true] %s161
          %164 = dma.hbm_to_vmem [thread:$0]  %s159, 32, %s162, %s150
        $region24: #{tpu_custom_call.1} parent=15 // pred_fallthru
          _
      $region16: #{tpu_custom_call.1} parent=5 // pred_fallthru
        _
      %p165 = scmp.le.s32.totalorder 1, %s14
      %p166 = scmp.lt.s32.totalorder %s14, 3
      %p167 = pnand %p165, %p166
      %p168 = pneg %p167
      // Predicated region
      $region25: #{tpu_custom_call.1} parent=5 // pred_check
        _
      $region26: #{tpu_custom_call.1} parent=5 // pred_check_branch
        %170 = sbr.rel (%p167) target = $region28
      $region27: #{tpu_custom_call.1} parent=5 // pred_region
        %s171 = ssub.s32 %s14, 1
        %s172 = sand.u32 %s41, 1
        %s173 = scalar_lea.sflag [#allocation6], %s172
        %s174 = sand.u32 %s41, 1
        %s175 = smul.addr %s174, 2
        %s176 = scalar_lea.vmem [#allocation5], %s175
        // Predicated region
        $region29: #{tpu_custom_call.1} parent=27 // pred_check
          %p177 = pneg %p54
        $region30: #{tpu_custom_call.1} parent=27 // pred_check_branch
          %179 = sbr.rel (%p177) target = $region32
        $region31: #{tpu_custom_call.1} parent=27 // pred_region
          %180 = dma.done %s173, 32
        $region32: #{tpu_custom_call.1} parent=27 // pred_fallthru
          _
        %s181 = sand.u32 %s69, 1
        %s182 = scalar_lea.sflag [#allocation8], %s181
        %s183 = sand.u32 %s69, 1
        %s184 = smul.addr %s183, 2
        %s185 = scalar_lea.vmem [#allocation7], %s184
        // Predicated region
        $region33: #{tpu_custom_call.1} parent=27 // pred_check
          %p186 = pneg %p82
        $region34: #{tpu_custom_call.1} parent=27 // pred_check_branch
          %188 = sbr.rel (%p186) target = $region36
        $region35: #{tpu_custom_call.1} parent=27 // pred_region
          %189 = dma.done %s182, 32
        $region36: #{tpu_custom_call.1} parent=27 // pred_fallthru
          _
        %s190 = sand.u32 %s41, 1
        %s191 = scalar_lea.sflag [#allocation6], %s190
        %s192 = sand.u32 %s41, 1
        %s193 = smul.addr %s192, 2
        %s194 = scalar_lea.vmem [#allocation5], %s193
        %p195 = pneg %p54
        %p196 = pneg %p51
        %s197 = sand.u32 %s69, 1
        %s198 = scalar_lea.sflag [#allocation8], %s197
        %s199 = sand.u32 %s69, 1
        %s200 = smul.addr %s199, 2
        %s201 = scalar_lea.vmem [#allocation7], %s200
        %p202 = pneg %p82
        %p203 = pneg %p79
        %p204 = pneg %p108
        %p205 = pneg %p105
        %p206 = scmp.lt.s32.totalorder %s23, 1
        %s207 = scalar_select %p206, %s23, 1
        %s208 = smul.addr %s207, 4
        %s209 = scalar_lea.vmem %s2, %s208
        %p210 = scmp.lt.s32.totalorder %s23, 1
        %s211 = scalar_select %p210, %s23, 1
        %s212 = smul.addr %s211, 4
        %s213 = scalar_lea.vmem %s2, %s212
        %p214 = scmp.eq.s32.totalorder %s24, 0
        // Predicated region
        $region37: #{tpu_custom_call.1} parent=27 // pred_check
          %p215 = pneg %p214
        $region38: #{tpu_custom_call.1} parent=27 // pred_check_branch
          %217 = sbr.rel (%p215) target = $region40
        $region39: #{tpu_custom_call.1} parent=27 // pred_region
          %218 = vst [vmem:[#allocation2] sm:$0x1] 0.0
          %219 = vst [vmem:[#allocation3] sm:$0x1] 0.0
          %220 = vst [vmem:[#allocation4] sm:$0x1] 0.0
        $region40: #{tpu_custom_call.1} parent=27 // pred_fallthru
          _
        %v221 = vld [vmem:[%s185] sm:$0x3]
        %v222 = vmul.f32 %v221, 0.5
        %v223 = vtanh.pop %v222
        %v224 = vmul.f32 %v223, 0.5
        %v225 = vadd.f32 %v224, 0.5
        %v226 = vld [vmem:[%s176] sm:$0x3]
        %vm227 = vcmp.gt.s32.totalorder %v226, 0
        %v228 = vld [vmem:[#allocation2] sm:$0x1]
        %vm229 = vcmask 1041408
        %v230 = vsel %vm229, %v225, 0.0
        %v231 = vrot.slane %v230, 4
        %v232 = vadd.f32 %v230, %v231
        %v233 = vrot.slane %v232, 2
        %v234 = vadd.f32 %v232, %v233
        %v235 = vrot.slane %v234, 1
        %v236 = vadd.f32 %v234, %v235
        %v237 = vadd.f32 %v228, %v236
        %238 = vst [vmem:[#allocation2] sm:$0x1] %v237
        %v239 = vld [vmem:[#allocation3] sm:$0x1]
        %v240 = vsel %vm227, 1, 0
        %v241 = vcvt.s32.f32 %v240
        %v242 = vsel %vm229, %v241, 0.0
        %v243 = vrot.slane %v242, 4
        %v244 = vadd.f32 %v242, %v243
        %v245 = vrot.slane %v244, 2
        %v246 = vadd.f32 %v244, %v245
        %v247 = vrot.slane %v246, 1
        %v248 = vadd.f32 %v246, %v247
        %v249 = vadd.f32 %v239, %v248
        %250 = vst [vmem:[#allocation3] sm:$0x1] %v249
        %v251 = vld [vmem:[#allocation4] sm:$0x1]
        %v252 = vsel %vm227, %v225, 0.0
        %v253 = vsel %vm229, %v252, 0.0
        %v254 = vrot.slane %v253, 4
        %v255 = vadd.f32 %v253, %v254
        %v256 = vrot.slane %v255, 2
        %v257 = vadd.f32 %v255, %v256
        %v258 = vrot.slane %v257, 1
        %v259 = vadd.f32 %v257, %v258
        %v260 = vadd.f32 %v251, %v259
        %261 = vst [vmem:[#allocation4] sm:$0x1] %v260
        // Predicated region
        $region41: #{tpu_custom_call.1} parent=27 // pred_check
          %p262 = pneg %p214
        $region42: #{tpu_custom_call.1} parent=27 // pred_check_branch
          %264 = sbr.rel (%p262) target = $region44
        $region43: #{tpu_custom_call.1} parent=27 // pred_region
          %v265 = vld [vmem:[#allocation2] sm:$0x1]
          %266 = vst [vmem:[%s213] sm:$0x1] %v265
          %v267 = vld [vmem:[#allocation3] sm:$0x1]
          %268 = vst [vmem:[%s213 + $0x1] sm:$0x1] %v267
          %v269 = vld [vmem:[#allocation4] sm:$0x1]
          %270 = vst [vmem:[%s213 + $0x2] sm:$0x1] %v269
        $region44: #{tpu_custom_call.1} parent=27 // pred_fallthru
          _
        %p271 = scmp.lt.s32.totalorder %s23, 1
        %s272 = scalar_select %p271, %s23, 1
        %s273 = smul.addr %s272, 4
        %s274 = scalar_lea.vmem %s2, %s273
        // Predicated region
        $region45: #{tpu_custom_call.1} parent=27 // pred_check
          %p275 = pneg %p105
        $region46: #{tpu_custom_call.1} parent=27 // pred_check_branch
          %277 = sbr.rel (%p275) target = $region48
        $region47: #{tpu_custom_call.1} parent=27 // pred_region
          _
        $region48: #{tpu_custom_call.1} parent=27 // pred_fallthru
          _
      $region28: #{tpu_custom_call.1} parent=5 // pred_fallthru
        _
      %p278 = scmp.le.s32.totalorder 2, %s14
      // Predicated region
      $region49: #{tpu_custom_call.1} parent=5 // pred_check
        %p279 = pneg %p278
      $region50: #{tpu_custom_call.1} parent=5 // pred_check_branch
        %281 = sbr.rel (%p279) target = $region52
      $region51: #{tpu_custom_call.1} parent=5 // pred_region
        %s282 = ssub.s32 %s14, 2
        // Predicated region
        $region53: #{tpu_custom_call.1} parent=51 // pred_check
          %p283 = pneg %p111
        $region54: #{tpu_custom_call.1} parent=51 // pred_check_branch
          %285 = sbr.rel (%p283) target = $region56
        $region55: #{tpu_custom_call.1} parent=51 // pred_region
          %p286 = scmp.lt.s32.totalorder %s25, 1
          %s287 = scalar_select %p286, %s25, 1
          %s288 = smul.addr %s287, 4
          %s289 = scalar_lea.vmem %s2, %s288
        $region56: #{tpu_custom_call.1} parent=51 // pred_fallthru
          _
      $region52: #{tpu_custom_call.1} parent=5 // pred_fallthru
        _
    $region6: #{tpu_custom_call.1} parent=1 // loop_footer
      %s18 = sadd.s32 1, %s14
    $region7: #{tpu_custom_call.1} parent=1 // loop_footer_branch
      %13 = sbr.rel target = $region3
    $region8: #{tpu_custom_call.1} parent=1 // loop_exit
      _
    %290 = vsyncpa [#allocation6], 1
    %s291 = scalar_lea.sflag [#allocation6], 1
    %292 = vsyncpa %s291, 1
    %293 = vsyncpa [#allocation8], 1
    %s294 = scalar_lea.sflag [#allocation8], 1
    %295 = vsyncpa %s294, 1

</llo_original>
